<compile_context>
chip_gen: v7x
topology: tpu7x:2x2x1
jax: 0.10.0
libtpu: 0.0.40
codegen_flags: <defaults>
</compile_context>

<pallas_src>
import jax
import jax.numpy as jnp
from jax.experimental import pallas as pl
from jax.experimental.pallas import tpu as pltpu


_TARGET_BLOCK_BYTES = 4 * 1024 * 1024  # ~4 MiB per side -> <=16 MiB double-buffered


def _patch_embed_kernel(x_ref, o_ref):
    # x_ref: (BB, TC, TL) tile of (B, C, L); o_ref: (BB, TL, TC) tile of (B, L, C).
    # Leading (batch) axis untouched -> per-slice XLU transposes, off the vst slot.
    o_ref[...] = jnp.transpose(x_ref[...], (0, 2, 1))


def _lane_tiles(dim: int):
    """128-multiple divisors of `dim`, descending (may be empty)."""
    return sorted((t for t in range(128, dim + 1, 128) if dim % t == 0),
                  reverse=True)


def _pick_tiles(B, C, L, itemsize, target_bytes=_TARGET_BLOCK_BYTES):
    # Channel tile: largest 128-multiple divisor of C that is <= 1024
    # (else the smallest 128-multiple divisor).  Caller guarantees C % 128 == 0.
    c_tiles = _lane_tiles(C)
    TC = next((t for t in c_tiles if t <= 1024), c_tiles[-1]) if c_tiles else C

    # Spatial tile: largest 128-multiple divisor of L that keeps one block
    # inside the byte budget; otherwise the (legal) full extent.
    l_tiles = _lane_tiles(L)
    budget_elems = max(1, target_bytes // (TC * itemsize))
    TL = next((t for t in l_tiles if t <= budget_elems),
              l_tiles[-1] if l_tiles else L)

    # Batch sub-block: pack images per grid step up to the byte budget so the
    # ~0.35 us per-step pipeline overhead is amortized even for small C*L.
    block_bytes = TC * TL * itemsize
    BB = 1
    for bb in range(B, 0, -1):
        if B % bb == 0 and bb * block_bytes <= target_bytes:
            BB = bb
            break
    return BB, TC, TL


def patch_embed(x):
    """x: (B, C, H, W) -> (B, H*W, C), matching torch's x.flatten(2).transpose(1, 2)."""
    B, C, H, W = x.shape
    L = H * W
    x_flat = x.reshape(B, C, L)  # free row-major reshape (glue, no data movement)

    if C % 128 != 0:
        # Tiny / non-lane-aligned channel counts (e.g. pre-projection C=3/4)
        # would force masked 3-4-lane output stores; plain XLA is faster there.
        return jnp.swapaxes(x_flat, 1, 2)

    itemsize = jnp.dtype(x.dtype).itemsize
    BB, TC, TL = _pick_tiles(B, C, L, itemsize)
    block_bytes = BB * TC * TL * itemsize
    # 2x double-buffered input + 2x double-buffered output, plus headroom for
    # the in-kernel transpose relayout.  <=4 MiB blocks keep this well inside
    # v7x's 64 MiB physical VMEM while raising v5e's 16 MiB scoped default.
    vmem_limit = int(max(32 * 1024 * 1024, 4 * block_bytes + (8 << 20)))

    grid = (B // BB, C // TC, L // TL)  # l innermost: read-side HBM locality

    grid_spec = pltpu.PrefetchScalarGridSpec(
        num_scalar_prefetch=0,
        grid=grid,
        in_specs=[
            # (B, C, L): block (BB, TC, TL) at block index (b, c, l).
            pl.BlockSpec((BB, TC, TL), lambda b, c, l: (b, c, l)),
        ],
        # (B, L, C): block (BB, TL, TC) at block index (b, l, c).
        out_specs=pl.BlockSpec((BB, TL, TC), lambda b, c, l: (b, l, c)),
    )

    return pl.pallas_call(
        _patch_embed_kernel,
        out_shape=jax.ShapeDtypeStruct((B, L, C), x.dtype),
        grid_spec=grid_spec,
        compiler_params=pltpu.CompilerParams(
            dimension_semantics=("parallel", "parallel", "parallel"),
            vmem_limit_bytes=vmem_limit,
        ),
    )(x_flat)


def _reference(x):
    B, C, H, W = x.shape
    return jnp.swapaxes(x.reshape(B, C, H * W), 1, 2)


if __name__ == "__main__":
    key = jax.random.PRNGKey(0)
    k1, k2, k3 = jax.random.split(key, 3)

    # Case 1: the module's literal toy shape (tiny pre-projection channels).
    # Dispatched to the XLA path (C < 128) per the perf review.
    x1 = jax.random.normal(k1, (2, 4, 16, 16), dtype=jnp.float32)
    y1 = patch_embed(x1)
    jax.block_until_ready(y1)
    assert y1.shape == (2, 16 * 16, 4), y1.shape
    assert jnp.array_equal(y1, _reference(x1)), "mismatch vs reference (case 1)"

    # Case 2: 128-multiple channel count -> Pallas kernel, lane-dense unmasked
    # stores, batch sub-blocking (BB=2), one fat grid step.
    x2 = jax.random.normal(k2, (2, 256, 16, 16), dtype=jnp.float32)
    y2 = patch_embed(x2)
    jax.block_until_ready(y2)
    assert y2.shape == (2, 16 * 16, 256), y2.shape
    assert jnp.array_equal(y2, _reference(x2)), "mismatch vs reference (case 2)"

    # Case 3: ViT-like spatial extent (14x14 -> L=196, no 128-multiple divisor),
    # exercising the full-extent-L block path through the Pallas kernel.
    x3 = jax.random.normal(k3, (2, 256, 14, 14), dtype=jnp.float32)
    y3 = patch_embed(x3)
    jax.block_until_ready(y3)
    assert y3.shape == (2, 14 * 14, 256), y3.shape
    assert jnp.array_equal(y3, _reference(x3)), "mismatch vs reference (case 3)"

    print("KERNEL_OK")
</pallas_src>

<mosaic_0001>
module attributes {stable_mosaic.version = 11 : i64} {
  func.func @_patch_embed_kernel(%arg0: i32, %arg1: i32, %arg2: i32, %arg3: memref<2x256x256xf32, #tpu.memory_space<vmem>>, %arg4: memref<2x256x256xf32, #tpu.memory_space<vmem>>) attributes {dimension_semantics = [#tpu.dimension_semantics<parallel>, #tpu.dimension_semantics<parallel>, #tpu.dimension_semantics<parallel>], iteration_bounds = array<i64: 1, 1, 1>, scalar_prefetch = 0 : i64, scratch_operands = 0 : i64, tpu.core_type = #tpu.core_type<tc>, window_params = [{transform_indices = @transform_0, window_bounds = array<i64: 2, 256, 256>}, {transform_indices = @transform_1, window_bounds = array<i64: 2, 256, 256>}]} {
    %c0 = arith.constant 0 : index
    %c0_0 = arith.constant 0 : index
    %c0_1 = arith.constant 0 : index
    %0 = vector.load %arg3[%c0, %c0_0, %c0_1] : memref<2x256x256xf32, #tpu.memory_space<vmem>>, vector<2x256x256xf32>
    %1 = tpu.transpose %0, [0, 2, 1] : vector<2x256x256xf32> -> vector<2x256x256xf32>
    %c0_2 = arith.constant 0 : index
    %c0_3 = arith.constant 0 : index
    %c0_4 = arith.constant 0 : index
    %2 = vector.load %arg4[%c0_2, %c0_3, %c0_4] : memref<2x256x256xf32, #tpu.memory_space<vmem>>, vector<2x256x256xf32>
    tpu.vector_store %arg4[%c0_2, %c0_3, %c0_4], %1 {strides = array<i32>} : memref<2x256x256xf32, #tpu.memory_space<vmem>>, vector<2x256x256xf32>,
    return
  }
  func.func @transform_0(%arg0: i32, %arg1: i32, %arg2: i32) -> (i32, i32, i32) {
    %c0_i32 = arith.constant 0 : i32
    return %arg0, %arg1, %arg2 : i32, i32, i32
  }
  func.func @transform_1(%arg0: i32, %arg1: i32, %arg2: i32) -> (i32, i32, i32) {
    %c0_i32 = arith.constant 0 : i32
    return %arg0, %arg2, %arg1 : i32, i32, i32
  }
}

</mosaic_0001>

<llo_original>
// kernel: tpu_custom_call.1
$region0: #{tpu_custom_call.1}
  #allocation0 [shape = 'u32[]', space=smem, size = 0x4, offset = 0x4, fixed_abs, tag = 'smem constant byte address 0x4 - core index']
  #allocation1 [shape = 'u32[144,128]{1,0:T(1,128)}', space=vmem, size = 0x12000, scoped, tag = 'internal scratch']
  %s0 = inlined_call_operand.hbm [shape: f32[2,256,256], index: 0, kind: input, shape index: {}]
  %s1 = inlined_call_operand.hbm [shape: f32[2,256,256], index: 1, kind: output, shape index: {}]
  %s2 = sld [smem:[#allocation0]]
  $region18: #{tpu_custom_call.1} parent=0
    _
  %s4 = ssub.s32 1, %s2
  %s5 = scalar_select 0, %s4, %s2
  $region1: #{tpu_custom_call.1} parent=0
    #allocation2 [shape = 'u8[524288]{0}', space=vmem, size = 0x80000, scoped, tag = 'input window, operand 0, single buffered']
    #allocation3 [shape = 's32[1]{0}', space=sflag, size = 0x4, scoped, tag = 'scoped memory for tpu_custom_call.1']
    #allocation4 [shape = 's32[1]{0}', space=sflag, size = 0x4, scoped, tag = 'scoped memory for tpu_custom_call.1']
    #allocation5 [shape = 'u8[524288]{0}', space=vmem, size = 0x80000, scoped, tag = 'output window, operand 0, single buffered']
    %6 = vsyncpa [#allocation3], 0
    %7 = vsyncpa [#allocation4], 0
    // Predicated region
    $region2: #{tpu_custom_call.1} parent=1 // pred_check
      _
    $region3: #{tpu_custom_call.1} parent=1 // pred_check_branch
      %9 = sbr.rel (0) target = $region5
    $region4: #{tpu_custom_call.1} parent=1 // pred_region
      %s11 = ssub.s32 16384, 16384
      %12 = vsyncadd [#allocation3], %s11
      %s13 = sshll.u32 [#allocation2], 4
      %s14 = int_to_ptr.vmem [resolvable:$true] %s13
      %19 = dma.hbm_to_vmem [thread:$0]  %s0, 16384, %s14, [#allocation3], 256, 256, 16
    $region5: #{tpu_custom_call.1} parent=1 // pred_fallthru
      _
    // Predicated region
    $region6: #{tpu_custom_call.1} parent=1 // pred_check
      _
    $region7: #{tpu_custom_call.1} parent=1 // pred_check_branch
      %21 = sbr.rel (0) target = $region9
    $region8: #{tpu_custom_call.1} parent=1 // pred_region
      %22 = dma.done [#allocation3], 16384
    $region9: #{tpu_custom_call.1} parent=1 // pred_fallthru
      _
    %v23 = vld [vmem:[#allocation2] sm:$0xff]
    %v24 = vld [vmem:[#allocation2 + $0x8] sm:$0xff]
    %v25 = vld [vmem:[#allocation2 + $0x10] sm:$0xff]
    %v26 = vld [vmem:[#allocation2 + $0x18] sm:$0xff]
    %v27 = vld [vmem:[#allocation2 + $0x20] sm:$0xff]
    %v28 = vld [vmem:[#allocation2 + $0x28] sm:$0xff]
    %v29 = vld [vmem:[#allocation2 + $0x30] sm:$0xff]
    %v30 = vld [vmem:[#allocation2 + $0x38] sm:$0xff]
    %v31 = vld [vmem:[#allocation2 + $0x40] sm:$0xff]
    %v32 = vld [vmem:[#allocation2 + $0x48] sm:$0xff]
    %v33 = vld [vmem:[#allocation2 + $0x50] sm:$0xff]
    %v34 = vld [vmem:[#allocation2 + $0x58] sm:$0xff]
    %v35 = vld [vmem:[#allocation2 + $0x60] sm:$0xff]
    %v36 = vld [vmem:[#allocation2 + $0x68] sm:$0xff]
    %v37 = vld [vmem:[#allocation2 + $0x70] sm:$0xff]
    %v38 = vld [vmem:[#allocation2 + $0x78] sm:$0xff]
    %v39 = vld [vmem:[#allocation2 + $0x80] sm:$0xff]
    %v40 = vld [vmem:[#allocation2 + $0x88] sm:$0xff]
    %v41 = vld [vmem:[#allocation2 + $0x90] sm:$0xff]
    %v42 = vld [vmem:[#allocation2 + $0x98] sm:$0xff]
    %v43 = vld [vmem:[#allocation2 + $0xa0] sm:$0xff]
    %v44 = vld [vmem:[#allocation2 + $0xa8] sm:$0xff]
    %v45 = vld [vmem:[#allocation2 + $0xb0] sm:$0xff]
    %v46 = vld [vmem:[#allocation2 + $0xb8] sm:$0xff]
    %v47 = vld [vmem:[#allocation2 + $0xc0] sm:$0xff]
    %v48 = vld [vmem:[#allocation2 + $0xc8] sm:$0xff]
    %v49 = vld [vmem:[#allocation2 + $0xd0] sm:$0xff]
    %v50 = vld [vmem:[#allocation2 + $0xd8] sm:$0xff]
    %v51 = vld [vmem:[#allocation2 + $0xe0] sm:$0xff]
    %v52 = vld [vmem:[#allocation2 + $0xe8] sm:$0xff]
    %v53 = vld [vmem:[#allocation2 + $0xf0] sm:$0xff]
    %v54 = vld [vmem:[#allocation2 + $0xf8] sm:$0xff]
    %v55 = vld [vmem:[#allocation2 + $0x100] sm:$0xff]
    %v56 = vld [vmem:[#allocation2 + $0x108] sm:$0xff]
    %v57 = vld [vmem:[#allocation2 + $0x110] sm:$0xff]
    %v58 = vld [vmem:[#allocation2 + $0x118] sm:$0xff]
    %v59 = vld [vmem:[#allocation2 + $0x120] sm:$0xff]
    %v60 = vld [vmem:[#allocation2 + $0x128] sm:$0xff]
    %v61 = vld [vmem:[#allocation2 + $0x130] sm:$0xff]
    %v62 = vld [vmem:[#allocation2 + $0x138] sm:$0xff]
    %v63 = vld [vmem:[#allocation2 + $0x140] sm:$0xff]
    %v64 = vld [vmem:[#allocation2 + $0x148] sm:$0xff]
    %v65 = vld [vmem:[#allocation2 + $0x150] sm:$0xff]
    %v66 = vld [vmem:[#allocation2 + $0x158] sm:$0xff]
    %v67 = vld [vmem:[#allocation2 + $0x160] sm:$0xff]
    %v68 = vld [vmem:[#allocation2 + $0x168] sm:$0xff]
    %v69 = vld [vmem:[#allocation2 + $0x170] sm:$0xff]
    %v70 = vld [vmem:[#allocation2 + $0x178] sm:$0xff]
    %v71 = vld [vmem:[#allocation2 + $0x180] sm:$0xff]
    %v72 = vld [vmem:[#allocation2 + $0x188] sm:$0xff]
    %v73 = vld [vmem:[#allocation2 + $0x190] sm:$0xff]
    %v74 = vld [vmem:[#allocation2 + $0x198] sm:$0xff]
    %v75 = vld [vmem:[#allocation2 + $0x1a0] sm:$0xff]
    %v76 = vld [vmem:[#allocation2 + $0x1a8] sm:$0xff]
    %v77 = vld [vmem:[#allocation2 + $0x1b0] sm:$0xff]
    %v78 = vld [vmem:[#allocation2 + $0x1b8] sm:$0xff]
    %v79 = vld [vmem:[#allocation2 + $0x1c0] sm:$0xff]
    %v80 = vld [vmem:[#allocation2 + $0x1c8] sm:$0xff]
    %v81 = vld [vmem:[#allocation2 + $0x1d0] sm:$0xff]
    %v82 = vld [vmem:[#allocation2 + $0x1d8] sm:$0xff]
    %v83 = vld [vmem:[#allocation2 + $0x1e0] sm:$0xff]
    %v84 = vld [vmem:[#allocation2 + $0x1e8] sm:$0xff]
    %v85 = vld [vmem:[#allocation2 + $0x1f0] sm:$0xff]
    %v86 = vld [vmem:[#allocation2 + $0x1f8] sm:$0xff]
    %v87 = vld [vmem:[#allocation2 + $0x200] sm:$0xff]
    %v88 = vld [vmem:[#allocation2 + $0x208] sm:$0xff]
    %v89 = vld [vmem:[#allocation2 + $0x210] sm:$0xff]
    %v90 = vld [vmem:[#allocation2 + $0x218] sm:$0xff]
    %v91 = vld [vmem:[#allocation2 + $0x220] sm:$0xff]
    %v92 = vld [vmem:[#allocation2 + $0x228] sm:$0xff]
    %v93 = vld [vmem:[#allocation2 + $0x230] sm:$0xff]
    %v94 = vld [vmem:[#allocation2 + $0x238] sm:$0xff]
    %v95 = vld [vmem:[#allocation2 + $0x240] sm:$0xff]
    %v96 = vld [vmem:[#allocation2 + $0x248] sm:$0xff]
    %v97 = vld [vmem:[#allocation2 + $0x250] sm:$0xff]
    %v98 = vld [vmem:[#allocation2 + $0x258] sm:$0xff]
    %v99 = vld [vmem:[#allocation2 + $0x260] sm:$0xff]
    %v100 = vld [vmem:[#allocation2 + $0x268] sm:$0xff]
    %v101 = vld [vmem:[#allocation2 + $0x270] sm:$0xff]
    %v102 = vld [vmem:[#allocation2 + $0x278] sm:$0xff]
    %v103 = vld [vmem:[#allocation2 + $0x280] sm:$0xff]
    %v104 = vld [vmem:[#allocation2 + $0x288] sm:$0xff]
    %v105 = vld [vmem:[#allocation2 + $0x290] sm:$0xff]
    %v106 = vld [vmem:[#allocation2 + $0x298] sm:$0xff]
    %v107 = vld [vmem:[#allocation2 + $0x2a0] sm:$0xff]
    %v108 = vld [vmem:[#allocation2 + $0x2a8] sm:$0xff]
    %v109 = vld [vmem:[#allocation2 + $0x2b0] sm:$0xff]
    %v110 = vld [vmem:[#allocation2 + $0x2b8] sm:$0xff]
    %v111 = vld [vmem:[#allocation2 + $0x2c0] sm:$0xff]
    %v112 = vld [vmem:[#allocation2 + $0x2c8] sm:$0xff]
    %v113 = vld [vmem:[#allocation2 + $0x2d0] sm:$0xff]
    %v114 = vld [vmem:[#allocation2 + $0x2d8] sm:$0xff]
    %v115 = vld [vmem:[#allocation2 + $0x2e0] sm:$0xff]
    %v116 = vld [vmem:[#allocation2 + $0x2e8] sm:$0xff]
    %v117 = vld [vmem:[#allocation2 + $0x2f0] sm:$0xff]
    %v118 = vld [vmem:[#allocation2 + $0x2f8] sm:$0xff]
    %v119 = vld [vmem:[#allocation2 + $0x300] sm:$0xff]
    %v120 = vld [vmem:[#allocation2 + $0x308] sm:$0xff]
    %v121 = vld [vmem:[#allocation2 + $0x310] sm:$0xff]
    %v122 = vld [vmem:[#allocation2 + $0x318] sm:$0xff]
    %v123 = vld [vmem:[#allocation2 + $0x320] sm:$0xff]
    %v124 = vld [vmem:[#allocation2 + $0x328] sm:$0xff]
    %v125 = vld [vmem:[#allocation2 + $0x330] sm:$0xff]
    %v126 = vld [vmem:[#allocation2 + $0x338] sm:$0xff]
    %v127 = vld [vmem:[#allocation2 + $0x340] sm:$0xff]
    %v128 = vld [vmem:[#allocation2 + $0x348] sm:$0xff]
    %v129 = vld [vmem:[#allocation2 + $0x350] sm:$0xff]
    %v130 = vld [vmem:[#allocation2 + $0x358] sm:$0xff]
    %v131 = vld [vmem:[#allocation2 + $0x360] sm:$0xff]
    %v132 = vld [vmem:[#allocation2 + $0x368] sm:$0xff]
    %v133 = vld [vmem:[#allocation2 + $0x370] sm:$0xff]
    %v134 = vld [vmem:[#allocation2 + $0x378] sm:$0xff]
    %v135 = vld [vmem:[#allocation2 + $0x380] sm:$0xff]
    %v136 = vld [vmem:[#allocation2 + $0x388] sm:$0xff]
    %v137 = vld [vmem:[#allocation2 + $0x390] sm:$0xff]
    %v138 = vld [vmem:[#allocation2 + $0x398] sm:$0xff]
    %v139 = vld [vmem:[#allocation2 + $0x3a0] sm:$0xff]
    %v140 = vld [vmem:[#allocation2 + $0x3a8] sm:$0xff]
    %v141 = vld [vmem:[#allocation2 + $0x3b0] sm:$0xff]
    %v142 = vld [vmem:[#allocation2 + $0x3b8] sm:$0xff]
    %v143 = vld [vmem:[#allocation2 + $0x3c0] sm:$0xff]
    %v144 = vld [vmem:[#allocation2 + $0x3c8] sm:$0xff]
    %v145 = vld [vmem:[#allocation2 + $0x3d0] sm:$0xff]
    %v146 = vld [vmem:[#allocation2 + $0x3d8] sm:$0xff]
    %v147 = vld [vmem:[#allocation2 + $0x3e0] sm:$0xff]
    %v148 = vld [vmem:[#allocation2 + $0x3e8] sm:$0xff]
    %v149 = vld [vmem:[#allocation2 + $0x3f0] sm:$0xff]
    %v150 = vld [vmem:[#allocation2 + $0x3f8] sm:$0xff]
    %151 = vxpose.xlu0.b32.start [1/16] %v23, 128
    %152 = vxpose.xlu0.b32.cont [2/16] %v25, 128
    %153 = vxpose.xlu0.b32.cont [3/16] %v27, 128
    %154 = vxpose.xlu0.b32.cont [4/16] %v29, 128
    %155 = vxpose.xlu0.b32.cont [5/16] %v31, 128
    %156 = vxpose.xlu0.b32.cont [6/16] %v33, 128
    %157 = vxpose.xlu0.b32.cont [7/16] %v35, 128
    %158 = vxpose.xlu0.b32.cont [8/16] %v37, 128
    %159 = vxpose.xlu0.b32.cont [9/16] %v39, 128
    %160 = vxpose.xlu0.b32.cont [10/16] %v41, 128
    %161 = vxpose.xlu0.b32.cont [11/16] %v43, 128
    %162 = vxpose.xlu0.b32.cont [12/16] %v45, 128
    %163 = vxpose.xlu0.b32.cont [13/16] %v47, 128
    %164 = vxpose.xlu0.b32.cont [14/16] %v49, 128
    %165 = vxpose.xlu0.b32.cont [15/16] %v51, 128
    %166 = vxpose.xlu0.b32.end [16/16] %v53, 128
    %v167 = vpop.trf.xlu0
    %v168 = vpop.trf.xlu0
    %v169 = vpop.trf.xlu0
    %v170 = vpop.trf.xlu0
    %v171 = vpop.trf.xlu0
    %v172 = vpop.trf.xlu0
    %v173 = vpop.trf.xlu0
    %v174 = vpop.trf.xlu0
    %v175 = vpop.trf.xlu0
    %v176 = vpop.trf.xlu0
    %v177 = vpop.trf.xlu0
    %v178 = vpop.trf.xlu0
    %v179 = vpop.trf.xlu0
    %v180 = vpop.trf.xlu0
    %v181 = vpop.trf.xlu0
    %v182 = vpop.trf.xlu0
    %183 = vxpose.xlu0.b32.start [1/16] %v24, 128
    %184 = vxpose.xlu0.b32.cont [2/16] %v26, 128
    %185 = vxpose.xlu0.b32.cont [3/16] %v28, 128
    %186 = vxpose.xlu0.b32.cont [4/16] %v30, 128
    %187 = vxpose.xlu0.b32.cont [5/16] %v32, 128
    %188 = vxpose.xlu0.b32.cont [6/16] %v34, 128
    %189 = vxpose.xlu0.b32.cont [7/16] %v36, 128
    %190 = vxpose.xlu0.b32.cont [8/16] %v38, 128
    %191 = vxpose.xlu0.b32.cont [9/16] %v40, 128
    %192 = vxpose.xlu0.b32.cont [10/16] %v42, 128
    %193 = vxpose.xlu0.b32.cont [11/16] %v44, 128
    %194 = vxpose.xlu0.b32.cont [12/16] %v46, 128
    %195 = vxpose.xlu0.b32.cont [13/16] %v48, 128
    %196 = vxpose.xlu0.b32.cont [14/16] %v50, 128
    %197 = vxpose.xlu0.b32.cont [15/16] %v52, 128
    %198 = vxpose.xlu0.b32.end [16/16] %v54, 128
    %v199 = vpop.trf.xlu0
    %v200 = vpop.trf.xlu0
    %v201 = vpop.trf.xlu0
    %v202 = vpop.trf.xlu0
    %v203 = vpop.trf.xlu0
    %v204 = vpop.trf.xlu0
    %v205 = vpop.trf.xlu0
    %v206 = vpop.trf.xlu0
    %v207 = vpop.trf.xlu0
    %v208 = vpop.trf.xlu0
    %v209 = vpop.trf.xlu0
    %v210 = vpop.trf.xlu0
    %v211 = vpop.trf.xlu0
    %v212 = vpop.trf.xlu0
    %v213 = vpop.trf.xlu0
    %v214 = vpop.trf.xlu0
    %215 = vxpose.xlu0.b32.start [1/16] %v55, 128
    %216 = vxpose.xlu0.b32.cont [2/16] %v57, 128
    %217 = vxpose.xlu0.b32.cont [3/16] %v59, 128
    %218 = vxpose.xlu0.b32.cont [4/16] %v61, 128
    %219 = vxpose.xlu0.b32.cont [5/16] %v63, 128
    %220 = vxpose.xlu0.b32.cont [6/16] %v65, 128
    %221 = vxpose.xlu0.b32.cont [7/16] %v67, 128
    %222 = vxpose.xlu0.b32.cont [8/16] %v69, 128
    %223 = vxpose.xlu0.b32.cont [9/16] %v71, 128
    %224 = vxpose.xlu0.b32.cont [10/16] %v73, 128
    %225 = vxpose.xlu0.b32.cont [11/16] %v75, 128
    %226 = vxpose.xlu0.b32.cont [12/16] %v77, 128
    %227 = vxpose.xlu0.b32.cont [13/16] %v79, 128
    %228 = vxpose.xlu0.b32.cont [14/16] %v81, 128
    %229 = vxpose.xlu0.b32.cont [15/16] %v83, 128
    %230 = vxpose.xlu0.b32.end [16/16] %v85, 128
    %v231 = vpop.trf.xlu0
    %v232 = vpop.trf.xlu0
    %v233 = vpop.trf.xlu0
    %v234 = vpop.trf.xlu0
    %v235 = vpop.trf.xlu0
    %v236 = vpop.trf.xlu0
    %v237 = vpop.trf.xlu0
    %v238 = vpop.trf.xlu0
    %v239 = vpop.trf.xlu0
    %v240 = vpop.trf.xlu0
    %v241 = vpop.trf.xlu0
    %v242 = vpop.trf.xlu0
    %v243 = vpop.trf.xlu0
    %v244 = vpop.trf.xlu0
    %v245 = vpop.trf.xlu0
    %v246 = vpop.trf.xlu0
    %247 = vxpose.xlu0.b32.start [1/16] %v56, 128
    %248 = vxpose.xlu0.b32.cont [2/16] %v58, 128
    %249 = vxpose.xlu0.b32.cont [3/16] %v60, 128
    %250 = vxpose.xlu0.b32.cont [4/16] %v62, 128
    %251 = vxpose.xlu0.b32.cont [5/16] %v64, 128
    %252 = vxpose.xlu0.b32.cont [6/16] %v66, 128
    %253 = vxpose.xlu0.b32.cont [7/16] %v68, 128
    %254 = vxpose.xlu0.b32.cont [8/16] %v70, 128
    %255 = vxpose.xlu0.b32.cont [9/16] %v72, 128
    %256 = vxpose.xlu0.b32.cont [10/16] %v74, 128
    %257 = vxpose.xlu0.b32.cont [11/16] %v76, 128
    %258 = vxpose.xlu0.b32.cont [12/16] %v78, 128
    %259 = vxpose.xlu0.b32.cont [13/16] %v80, 128
    %260 = vxpose.xlu0.b32.cont [14/16] %v82, 128
    %261 = vxpose.xlu0.b32.cont [15/16] %v84, 128
    %262 = vxpose.xlu0.b32.end [16/16] %v86, 128
    %v263 = vpop.trf.xlu0
    %v264 = vpop.trf.xlu0
    %v265 = vpop.trf.xlu0
    %v266 = vpop.trf.xlu0
    %v267 = vpop.trf.xlu0
    %v268 = vpop.trf.xlu0
    %v269 = vpop.trf.xlu0
    %v270 = vpop.trf.xlu0
    %v271 = vpop.trf.xlu0
    %v272 = vpop.trf.xlu0
    %v273 = vpop.trf.xlu0
    %v274 = vpop.trf.xlu0
    %v275 = vpop.trf.xlu0
    %v276 = vpop.trf.xlu0
    %v277 = vpop.trf.xlu0
    %v278 = vpop.trf.xlu0
    %279 = vxpose.xlu0.b32.start [1/16] %v87, 128
    %280 = vxpose.xlu0.b32.cont [2/16] %v89, 128
    %281 = vxpose.xlu0.b32.cont [3/16] %v91, 128
    %282 = vxpose.xlu0.b32.cont [4/16] %v93, 128
    %283 = vxpose.xlu0.b32.cont [5/16] %v95, 128
    %284 = vxpose.xlu0.b32.cont [6/16] %v97, 128
    %285 = vxpose.xlu0.b32.cont [7/16] %v99, 128
    %286 = vxpose.xlu0.b32.cont [8/16] %v101, 128
    %287 = vxpose.xlu0.b32.cont [9/16] %v103, 128
    %288 = vxpose.xlu0.b32.cont [10/16] %v105, 128
    %289 = vxpose.xlu0.b32.cont [11/16] %v107, 128
    %290 = vxpose.xlu0.b32.cont [12/16] %v109, 128
    %291 = vxpose.xlu0.b32.cont [13/16] %v111, 128
    %292 = vxpose.xlu0.b32.cont [14/16] %v113, 128
    %293 = vxpose.xlu0.b32.cont [15/16] %v115, 128
    %294 = vxpose.xlu0.b32.end [16/16] %v117, 128
    %v295 = vpop.trf.xlu0
    %v296 = vpop.trf.xlu0
    %v297 = vpop.trf.xlu0
    %v298 = vpop.trf.xlu0
    %v299 = vpop.trf.xlu0
    %v300 = vpop.trf.xlu0
    %v301 = vpop.trf.xlu0
    %v302 = vpop.trf.xlu0
    %v303 = vpop.trf.xlu0
    %v304 = vpop.trf.xlu0
    %v305 = vpop.trf.xlu0
    %v306 = vpop.trf.xlu0
    %v307 = vpop.trf.xlu0
    %v308 = vpop.trf.xlu0
    %v309 = vpop.trf.xlu0
    %v310 = vpop.trf.xlu0
    %311 = vxpose.xlu0.b32.start [1/16] %v88, 128
    %312 = vxpose.xlu0.b32.cont [2/16] %v90, 128
    %313 = vxpose.xlu0.b32.cont [3/16] %v92, 128
    %314 = vxpose.xlu0.b32.cont [4/16] %v94, 128
    %315 = vxpose.xlu0.b32.cont [5/16] %v96, 128
    %316 = vxpose.xlu0.b32.cont [6/16] %v98, 128
    %317 = vxpose.xlu0.b32.cont [7/16] %v100, 128
    %318 = vxpose.xlu0.b32.cont [8/16] %v102, 128
    %319 = vxpose.xlu0.b32.cont [9/16] %v104, 128
    %320 = vxpose.xlu0.b32.cont [10/16] %v106, 128
    %321 = vxpose.xlu0.b32.cont [11/16] %v108, 128
    %322 = vxpose.xlu0.b32.cont [12/16] %v110, 128
    %323 = vxpose.xlu0.b32.cont [13/16] %v112, 128
    %324 = vxpose.xlu0.b32.cont [14/16] %v114, 128
    %325 = vxpose.xlu0.b32.cont [15/16] %v116, 128
    %326 = vxpose.xlu0.b32.end [16/16] %v118, 128
    %v327 = vpop.trf.xlu0
    %v328 = vpop.trf.xlu0
    %v329 = vpop.trf.xlu0
    %v330 = vpop.trf.xlu0
    %v331 = vpop.trf.xlu0
    %v332 = vpop.trf.xlu0
    %v333 = vpop.trf.xlu0
    %v334 = vpop.trf.xlu0
    %v335 = vpop.trf.xlu0
    %v336 = vpop.trf.xlu0
    %v337 = vpop.trf.xlu0
    %v338 = vpop.trf.xlu0
    %v339 = vpop.trf.xlu0
    %v340 = vpop.trf.xlu0
    %v341 = vpop.trf.xlu0
    %v342 = vpop.trf.xlu0
    %343 = vxpose.xlu0.b32.start [1/16] %v119, 128
    %344 = vxpose.xlu0.b32.cont [2/16] %v121, 128
    %345 = vxpose.xlu0.b32.cont [3/16] %v123, 128
    %346 = vxpose.xlu0.b32.cont [4/16] %v125, 128
    %347 = vxpose.xlu0.b32.cont [5/16] %v127, 128
    %348 = vxpose.xlu0.b32.cont [6/16] %v129, 128
    %349 = vxpose.xlu0.b32.cont [7/16] %v131, 128
    %350 = vxpose.xlu0.b32.cont [8/16] %v133, 128
    %351 = vxpose.xlu0.b32.cont [9/16] %v135, 128
    %352 = vxpose.xlu0.b32.cont [10/16] %v137, 128
    %353 = vxpose.xlu0.b32.cont [11/16] %v139, 128
    %354 = vxpose.xlu0.b32.cont [12/16] %v141, 128
    %355 = vxpose.xlu0.b32.cont [13/16] %v143, 128
    %356 = vxpose.xlu0.b32.cont [14/16] %v145, 128
    %357 = vxpose.xlu0.b32.cont [15/16] %v147, 128
    %358 = vxpose.xlu0.b32.end [16/16] %v149, 128
    %v359 = vpop.trf.xlu0
    %v360 = vpop.trf.xlu0
    %v361 = vpop.trf.xlu0
    %v362 = vpop.trf.xlu0
    %v363 = vpop.trf.xlu0
    %v364 = vpop.trf.xlu0
    %v365 = vpop.trf.xlu0
    %v366 = vpop.trf.xlu0
    %v367 = vpop.trf.xlu0
    %v368 = vpop.trf.xlu0
    %v369 = vpop.trf.xlu0
    %v370 = vpop.trf.xlu0
    %v371 = vpop.trf.xlu0
    %v372 = vpop.trf.xlu0
    %v373 = vpop.trf.xlu0
    %v374 = vpop.trf.xlu0
    %375 = vxpose.xlu0.b32.start [1/16] %v120, 128
    %376 = vxpose.xlu0.b32.cont [2/16] %v122, 128
    %377 = vxpose.xlu0.b32.cont [3/16] %v124, 128
    %378 = vxpose.xlu0.b32.cont [4/16] %v126, 128
    %379 = vxpose.xlu0.b32.cont [5/16] %v128, 128
    %380 = vxpose.xlu0.b32.cont [6/16] %v130, 128
    %381 = vxpose.xlu0.b32.cont [7/16] %v132, 128
    %382 = vxpose.xlu0.b32.cont [8/16] %v134, 128
    %383 = vxpose.xlu0.b32.cont [9/16] %v136, 128
    %384 = vxpose.xlu0.b32.cont [10/16] %v138, 128
    %385 = vxpose.xlu0.b32.cont [11/16] %v140, 128
    %386 = vxpose.xlu0.b32.cont [12/16] %v142, 128
    %387 = vxpose.xlu0.b32.cont [13/16] %v144, 128
    %388 = vxpose.xlu0.b32.cont [14/16] %v146, 128
    %389 = vxpose.xlu0.b32.cont [15/16] %v148, 128
    %390 = vxpose.xlu0.b32.end [16/16] %v150, 128
    %v391 = vpop.trf.xlu0
    %v392 = vpop.trf.xlu0
    %v393 = vpop.trf.xlu0
    %v394 = vpop.trf.xlu0
    %v395 = vpop.trf.xlu0
    %v396 = vpop.trf.xlu0
    %v397 = vpop.trf.xlu0
    %v398 = vpop.trf.xlu0
    %v399 = vpop.trf.xlu0
    %v400 = vpop.trf.xlu0
    %v401 = vpop.trf.xlu0
    %v402 = vpop.trf.xlu0
    %v403 = vpop.trf.xlu0
    %v404 = vpop.trf.xlu0
    %v405 = vpop.trf.xlu0
    %v406 = vpop.trf.xlu0
    %407 = vst [vmem:[#allocation5] sm:$0xff] %v167
    %408 = vst [vmem:[#allocation5 + $0x8] sm:$0xff] %v231
    %409 = vst [vmem:[#allocation5 + $0x10] sm:$0xff] %v168
    %410 = vst [vmem:[#allocation5 + $0x18] sm:$0xff] %v232
    %411 = vst [vmem:[#allocation5 + $0x20] sm:$0xff] %v169
    %412 = vst [vmem:[#allocation5 + $0x28] sm:$0xff] %v233
    %413 = vst [vmem:[#allocation5 + $0x30] sm:$0xff] %v170
    %414 = vst [vmem:[#allocation5 + $0x38] sm:$0xff] %v234
    %415 = vst [vmem:[#allocation5 + $0x40] sm:$0xff] %v171
    %416 = vst [vmem:[#allocation5 + $0x48] sm:$0xff] %v235
    %417 = vst [vmem:[#allocation5 + $0x50] sm:$0xff] %v172
    %418 = vst [vmem:[#allocation5 + $0x58] sm:$0xff] %v236
    %419 = vst [vmem:[#allocation5 + $0x60] sm:$0xff] %v173
    %420 = vst [vmem:[#allocation5 + $0x68] sm:$0xff] %v237
    %421 = vst [vmem:[#allocation5 + $0x70] sm:$0xff] %v174
    %422 = vst [vmem:[#allocation5 + $0x78] sm:$0xff] %v238
    %423 = vst [vmem:[#allocation5 + $0x80] sm:$0xff] %v175
    %424 = vst [vmem:[#allocation5 + $0x88] sm:$0xff] %v239
    %425 = vst [vmem:[#allocation5 + $0x90] sm:$0xff] %v176
    %426 = vst [vmem:[#allocation5 + $0x98] sm:$0xff] %v240
    %427 = vst [vmem:[#allocation5 + $0xa0] sm:$0xff] %v177
    %428 = vst [vmem:[#allocation5 + $0xa8] sm:$0xff] %v241
    %429 = vst [vmem:[#allocation5 + $0xb0] sm:$0xff] %v178
    %430 = vst [vmem:[#allocation5 + $0xb8] sm:$0xff] %v242
    %431 = vst [vmem:[#allocation5 + $0xc0] sm:$0xff] %v179
    %432 = vst [vmem:[#allocation5 + $0xc8] sm:$0xff] %v243
    %433 = vst [vmem:[#allocation5 + $0xd0] sm:$0xff] %v180
    %434 = vst [vmem:[#allocation5 + $0xd8] sm:$0xff] %v244
    %435 = vst [vmem:[#allocation5 + $0xe0] sm:$0xff] %v181
    %436 = vst [vmem:[#allocation5 + $0xe8] sm:$0xff] %v245
    %437 = vst [vmem:[#allocation5 + $0xf0] sm:$0xff] %v182
    %438 = vst [vmem:[#allocation5 + $0xf8] sm:$0xff] %v246
    %439 = vst [vmem:[#allocation5 + $0x100] sm:$0xff] %v199
    %440 = vst [vmem:[#allocation5 + $0x108] sm:$0xff] %v263
    %441 = vst [vmem:[#allocation5 + $0x110] sm:$0xff] %v200
    %442 = vst [vmem:[#allocation5 + $0x118] sm:$0xff] %v264
    %443 = vst [vmem:[#allocation5 + $0x120] sm:$0xff] %v201
    %444 = vst [vmem:[#allocation5 + $0x128] sm:$0xff] %v265
    %445 = vst [vmem:[#allocation5 + $0x130] sm:$0xff] %v202
    %446 = vst [vmem:[#allocation5 + $0x138] sm:$0xff] %v266
    %447 = vst [vmem:[#allocation5 + $0x140] sm:$0xff] %v203
    %448 = vst [vmem:[#allocation5 + $0x148] sm:$0xff] %v267
    %449 = vst [vmem:[#allocation5 + $0x150] sm:$0xff] %v204
    %450 = vst [vmem:[#allocation5 + $0x158] sm:$0xff] %v268
    %451 = vst [vmem:[#allocation5 + $0x160] sm:$0xff] %v205
    %452 = vst [vmem:[#allocation5 + $0x168] sm:$0xff] %v269
    %453 = vst [vmem:[#allocation5 + $0x170] sm:$0xff] %v206
    %454 = vst [vmem:[#allocation5 + $0x178] sm:$0xff] %v270
    %455 = vst [vmem:[#allocation5 + $0x180] sm:$0xff] %v207
    %456 = vst [vmem:[#allocation5 + $0x188] sm:$0xff] %v271
    %457 = vst [vmem:[#allocation5 + $0x190] sm:$0xff] %v208
    %458 = vst [vmem:[#allocation5 + $0x198] sm:$0xff] %v272
    %459 = vst [vmem:[#allocation5 + $0x1a0] sm:$0xff] %v209
    %460 = vst [vmem:[#allocation5 + $0x1a8] sm:$0xff] %v273
    %461 = vst [vmem:[#allocation5 + $0x1b0] sm:$0xff] %v210
    %462 = vst [vmem:[#allocation5 + $0x1b8] sm:$0xff] %v274
    %463 = vst [vmem:[#allocation5 + $0x1c0] sm:$0xff] %v211
    %464 = vst [vmem:[#allocation5 + $0x1c8] sm:$0xff] %v275
    %465 = vst [vmem:[#allocation5 + $0x1d0] sm:$0xff] %v212
    %466 = vst [vmem:[#allocation5 + $0x1d8] sm:$0xff] %v276
    %467 = vst [vmem:[#allocation5 + $0x1e0] sm:$0xff] %v213
    %468 = vst [vmem:[#allocation5 + $0x1e8] sm:$0xff] %v277
    %469 = vst [vmem:[#allocation5 + $0x1f0] sm:$0xff] %v214
    %470 = vst [vmem:[#allocation5 + $0x1f8] sm:$0xff] %v278
    %471 = vst [vmem:[#allocation5 + $0x200] sm:$0xff] %v295
    %472 = vst [vmem:[#allocation5 + $0x208] sm:$0xff] %v359
    %473 = vst [vmem:[#allocation5 + $0x210] sm:$0xff] %v296
    %474 = vst [vmem:[#allocation5 + $0x218] sm:$0xff] %v360
    %475 = vst [vmem:[#allocation5 + $0x220] sm:$0xff] %v297
    %476 = vst [vmem:[#allocation5 + $0x228] sm:$0xff] %v361
    %477 = vst [vmem:[#allocation5 + $0x230] sm:$0xff] %v298
    %478 = vst [vmem:[#allocation5 + $0x238] sm:$0xff] %v362
    %479 = vst [vmem:[#allocation5 + $0x240] sm:$0xff] %v299
    %480 = vst [vmem:[#allocation5 + $0x248] sm:$0xff] %v363
    %481 = vst [vmem:[#allocation5 + $0x250] sm:$0xff] %v300
    %482 = vst [vmem:[#allocation5 + $0x258] sm:$0xff] %v364
    %483 = vst [vmem:[#allocation5 + $0x260] sm:$0xff] %v301
    %484 = vst [vmem:[#allocation5 + $0x268] sm:$0xff] %v365
    %485 = vst [vmem:[#allocation5 + $0x270] sm:$0xff] %v302
    %486 = vst [vmem:[#allocation5 + $0x278] sm:$0xff] %v366
    %487 = vst [vmem:[#allocation5 + $0x280] sm:$0xff] %v303
    %488 = vst [vmem:[#allocation5 + $0x288] sm:$0xff] %v367
    %489 = vst [vmem:[#allocation5 + $0x290] sm:$0xff] %v304
    %490 = vst [vmem:[#allocation5 + $0x298] sm:$0xff] %v368
    %491 = vst [vmem:[#allocation5 + $0x2a0] sm:$0xff] %v305
    %492 = vst [vmem:[#allocation5 + $0x2a8] sm:$0xff] %v369
    %493 = vst [vmem:[#allocation5 + $0x2b0] sm:$0xff] %v306
    %494 = vst [vmem:[#allocation5 + $0x2b8] sm:$0xff] %v370
    %495 = vst [vmem:[#allocation5 + $0x2c0] sm:$0xff] %v307
    %496 = vst [vmem:[#allocation5 + $0x2c8] sm:$0xff] %v371
    %497 = vst [vmem:[#allocation5 + $0x2d0] sm:$0xff] %v308
    %498 = vst [vmem:[#allocation5 + $0x2d8] sm:$0xff] %v372
    %499 = vst [vmem:[#allocation5 + $0x2e0] sm:$0xff] %v309
    %500 = vst [vmem:[#allocation5 + $0x2e8] sm:$0xff] %v373
    %501 = vst [vmem:[#allocation5 + $0x2f0] sm:$0xff] %v310
    %502 = vst [vmem:[#allocation5 + $0x2f8] sm:$0xff] %v374
    %503 = vst [vmem:[#allocation5 + $0x300] sm:$0xff] %v327
    %504 = vst [vmem:[#allocation5 + $0x308] sm:$0xff] %v391
    %505 = vst [vmem:[#allocation5 + $0x310] sm:$0xff] %v328
    %506 = vst [vmem:[#allocation5 + $0x318] sm:$0xff] %v392
    %507 = vst [vmem:[#allocation5 + $0x320] sm:$0xff] %v329
    %508 = vst [vmem:[#allocation5 + $0x328] sm:$0xff] %v393
    %509 = vst [vmem:[#allocation5 + $0x330] sm:$0xff] %v330
    %510 = vst [vmem:[#allocation5 + $0x338] sm:$0xff] %v394
    %511 = vst [vmem:[#allocation5 + $0x340] sm:$0xff] %v331
    %512 = vst [vmem:[#allocation5 + $0x348] sm:$0xff] %v395
    %513 = vst [vmem:[#allocation5 + $0x350] sm:$0xff] %v332
    %514 = vst [vmem:[#allocation5 + $0x358] sm:$0xff] %v396
    %515 = vst [vmem:[#allocation5 + $0x360] sm:$0xff] %v333
    %516 = vst [vmem:[#allocation5 + $0x368] sm:$0xff] %v397
    %517 = vst [vmem:[#allocation5 + $0x370] sm:$0xff] %v334
    %518 = vst [vmem:[#allocation5 + $0x378] sm:$0xff] %v398
    %519 = vst [vmem:[#allocation5 + $0x380] sm:$0xff] %v335
    %520 = vst [vmem:[#allocation5 + $0x388] sm:$0xff] %v399
    %521 = vst [vmem:[#allocation5 + $0x390] sm:$0xff] %v336
    %522 = vst [vmem:[#allocation5 + $0x398] sm:$0xff] %v400
    %523 = vst [vmem:[#allocation5 + $0x3a0] sm:$0xff] %v337
    %524 = vst [vmem:[#allocation5 + $0x3a8] sm:$0xff] %v401
    %525 = vst [vmem:[#allocation5 + $0x3b0] sm:$0xff] %v338
    %526 = vst [vmem:[#allocation5 + $0x3b8] sm:$0xff] %v402
    %527 = vst [vmem:[#allocation5 + $0x3c0] sm:$0xff] %v339
    %528 = vst [vmem:[#allocation5 + $0x3c8] sm:$0xff] %v403
    %529 = vst [vmem:[#allocation5 + $0x3d0] sm:$0xff] %v340
    %530 = vst [vmem:[#allocation5 + $0x3d8] sm:$0xff] %v404
    %531 = vst [vmem:[#allocation5 + $0x3e0] sm:$0xff] %v341
    %532 = vst [vmem:[#allocation5 + $0x3e8] sm:$0xff] %v405
    %533 = vst [vmem:[#allocation5 + $0x3f0] sm:$0xff] %v342
    %534 = vst [vmem:[#allocation5 + $0x3f8] sm:$0xff] %v406
    // Predicated region
    $region10: #{tpu_custom_call.1} parent=1 // pred_check
      _
    $region11: #{tpu_custom_call.1} parent=1 // pred_check_branch
      %536 = sbr.rel (0) target = $region13
    $region12: #{tpu_custom_call.1} parent=1 // pred_region
      %s538 = ssub.s32 16384, 16384
      %539 = vsyncadd [#allocation4], %s538
      %s540 = sshll.u32 [#allocation5], 4
      %s541 = int_to_ptr.vmem [resolvable:$true] %s540
      %546 = dma.vmem_to_hbm [thread:$0]  %s541, 16384, %s1, [#allocation4], 256, 256, 16
    $region13: #{tpu_custom_call.1} parent=1 // pred_fallthru
      _
    // Predicated region
    $region14: #{tpu_custom_call.1} parent=1 // pred_check
      _
    $region15: #{tpu_custom_call.1} parent=1 // pred_check_branch
      %548 = sbr.rel (0) target = $region17
    $region16: #{tpu_custom_call.1} parent=1 // pred_region
      %549 = dma.done [#allocation4], 16384
    $region17: #{tpu_custom_call.1} parent=1 // pred_fallthru
      _
    %550 = vsyncpa [#allocation3], 1
    %551 = vsyncpa [#allocation4], 1

</llo_original>
